<compile_context>
chip_gen: v7x
topology: tpu7x:2x2x1
jax: 0.10.0
libtpu: 0.0.40
codegen_flags: <defaults>
</compile_context>

<pallas_src>
import functools
import math

import jax
import jax.numpy as jnp
from jax.experimental import pallas as pl
from jax.experimental.pallas import tpu as pltpu

DICE_WEIGHT = 1.0   # module default dice_weight=1
BCE_WEIGHT = 1.0    # module default BCE_weight=1
_SMOOTH = 1e-5
_SUBLANES = 8       # sublane rows per batch (sublane-dense layout)
_LANE = 128
_TN_MAX = 4096      # max lane block: 2 inputs x 2 bufs x (B*8, 4096) f32 << VMEM (all chips)


def _wdice_bce_kernel(lv_ref, x_ref, t_ref, out_ref,
                      pt_acc, pp_acc, tt_acc,
                      pcnt_acc, ncnt_acc, psum_acc, nsum_acc,
                      *, batch, n_pad):
    # lv_ref: (1,) f32 SMEM; x_ref/t_ref: (B*8, TN) VMEM; out_ref: (1,1) f32 VMEM
    # scratches: seven (B*8, 1) f32 VMEM accumulators (persist across grid steps)
    j = pl.program_id(0)

    @pl.when(j == 0)
    def _init():
        for acc in (pt_acc, pp_acc, tt_acc, pcnt_acc, ncnt_acc, psum_acc, nsum_acc):
            acc[...] = jnp.zeros_like(acc)

    p = x_ref[...].astype(jnp.float32)
    t = t_ref[...].astype(jnp.float32)

    # ---- dice partial sums (the [0.5,0.5] weights are folded in at finalize) ----
    pt_acc[...] += jnp.sum(p * t, axis=-1, keepdims=True)
    pp_acc[...] += jnp.sum(p * p, axis=-1, keepdims=True)
    tt_acc[...] += jnp.sum(t * t, axis=-1, keepdims=True)

    # ---- BCE partial sums (per-element divides hoisted to finalize) ----
    # PyTorch F.binary_cross_entropy clamps log at -100.
    log_p = jnp.maximum(jnp.log(p), -100.0)
    log_1mp = jnp.maximum(jnp.log(1.0 - p), -100.0)
    bce = -(t * log_p + (1.0 - t) * log_1mp)
    pos = (t > 0.5).astype(jnp.float32)
    neg = (t < 0.5).astype(jnp.float32)
    pcnt_acc[...] += jnp.sum(pos, axis=-1, keepdims=True)
    ncnt_acc[...] += jnp.sum(neg, axis=-1, keepdims=True)
    psum_acc[...] += jnp.sum(pos * bce, axis=-1, keepdims=True)
    nsum_acc[...] += jnp.sum(neg * bce, axis=-1, keepdims=True)

    @pl.when(j == pl.num_programs(0) - 1)
    def _finalize():
        # Dice: fold the 8 sublane rows of each batch, apply weights on scalars.
        # inter = 0.25*sum(p*t), union = 0.25*(sum(p*p)+sum(t*t))
        dice_sum = jnp.float32(0.0)
        pt_all = pt_acc[...]
        pp_all = pp_acc[...]
        tt_all = tt_acc[...]
        for b in range(batch):                       # static unroll, B is small
            sl = slice(b * _SUBLANES, (b + 1) * _SUBLANES)
            pt_b = jnp.sum(pt_all[sl, :])
            pp_b = jnp.sum(pp_all[sl, :])
            tt_b = jnp.sum(tt_all[sl, :])
            dice_b = 1.0 - (0.5 * pt_b + _SMOOTH) / (0.25 * (pp_b + tt_b) + _SMOOTH)
            dice_sum = dice_sum + dice_b
        dice_loss = dice_sum / batch

        # BCE: two scalar divides only (hoisted out of the element loop).
        pos_w = jnp.sum(pcnt_acc[...]) + 1e-12
        # zero-padded elements have t == 0 -> they only inflate the neg count
        neg_w = jnp.sum(ncnt_acc[...]) - jnp.float32(n_pad) + 1e-12
        bce_loss = (0.5 * jnp.sum(psum_acc[...]) / pos_w
                    + 0.5 * jnp.sum(nsum_acc[...]) / neg_w)

        total = DICE_WEIGHT * dice_loss + BCE_WEIGHT * bce_loss + 0.1 * lv_ref[0]
        out_ref[...] = jnp.full((1, 1), total, dtype=out_ref.dtype)


def weighted_dice_bce_unsup(inputs, targets, lv_loss):
    """inputs/targets: (B, C, H, W) probabilities / labels in [0,1]; lv_loss: scalar."""
    b = inputs.shape[0]
    n0 = int(math.prod(inputs.shape[1:]))

    min_chunk = _SUBLANES * _LANE          # 1024 elems / batch row minimum
    max_chunk = _SUBLANES * _TN_MAX        # one grid step at most this big
    if n0 <= max_chunk:
        n_p = -(-n0 // min_chunk) * min_chunk
        tn = n_p // _SUBLANES
    else:
        n_p = -(-n0 // max_chunk) * max_chunk
        tn = _TN_MAX
    m = n_p // _SUBLANES                   # per-sublane-row length
    grid = m // tn
    n_pad_total = b * (n_p - n0)           # static; corrects the neg count

    def prep(a):
        a2 = a.reshape(b, n0)              # keep native dtype (kernel casts to f32)
        if n_p != n0:
            a2 = jnp.pad(a2, ((0, 0), (0, n_p - n0)))
        return a2.reshape(b * _SUBLANES, m)   # sublane-dense: 8 rows per batch

    x = prep(inputs)
    t = prep(targets)
    lv = jnp.asarray(lv_loss, dtype=jnp.float32).reshape(1)

    bs = b * _SUBLANES
    kernel = functools.partial(_wdice_bce_kernel, batch=b, n_pad=n_pad_total)

    # TODO(synk): optional v7x megacore split (leading 'parallel' axis of size 2
    # with partial accumulators combined in the wrapper) not implemented.
    out = pl.pallas_call(
        kernel,
        out_shape=jax.ShapeDtypeStruct((1, 1), jnp.float32),
        grid=(grid,),
        in_specs=[
            pl.BlockSpec(memory_space=pltpu.MemorySpace.SMEM),   # LV_loss scalar
            pl.BlockSpec((bs, tn), lambda j: (0, j)),            # inputs  (B*8, M)
            pl.BlockSpec((bs, tn), lambda j: (0, j)),            # targets (B*8, M)
        ],
        out_specs=pl.BlockSpec((1, 1), lambda j: (0, 0)),
        scratch_shapes=[pltpu.VMEM((bs, 1), jnp.float32) for _ in range(7)],
        compiler_params=pltpu.CompilerParams(
            dimension_semantics=("arbitrary",)),
    )(lv, x, t)
    return out[0, 0]


def _reference(inputs, targets, lv_loss):
    """Pure-JAX reference mirroring the PyTorch module."""
    b = inputs.shape[0]
    p = inputs.reshape(b, -1).astype(jnp.float32)
    t = targets.reshape(b, -1).astype(jnp.float32)
    # WeightedDiceLoss([0.5, 0.5]): w = t*(0.5-0.5)+0.5 == 0.5
    wp, wt = 0.5 * p, 0.5 * t
    inter = jnp.sum(wp * wt, axis=-1)
    union = jnp.sum(wp * wp, axis=-1) + jnp.sum(wt * wt, axis=-1)
    dice = jnp.mean(1.0 - (2.0 * inter + _SMOOTH) / (union + _SMOOTH))
    # WeightedBCE([0.5, 0.5])
    pf, tf = p.reshape(-1), t.reshape(-1)
    bce_elem = -(tf * jnp.maximum(jnp.log(pf), -100.0)
                 + (1.0 - tf) * jnp.maximum(jnp.log(1.0 - pf), -100.0))
    pos = (tf > 0.5).astype(jnp.float32)
    neg = (tf < 0.5).astype(jnp.float32)
    bce = jnp.sum(0.5 * pos * bce_elem / (pos.sum() + 1e-12)
                  + 0.5 * neg * bce_elem / (neg.sum() + 1e-12))
    return DICE_WEIGHT * dice + BCE_WEIGHT * bce + 0.1 * jnp.asarray(lv_loss, jnp.float32)


if __name__ == "__main__":
    key = jax.random.PRNGKey(0)
    k1, k2, k3 = jax.random.split(key, 3)

    B, C, H, W = 2, 4, 16, 16
    # inputs are probabilities (as in BCE), targets are binary masks
    inputs = jax.nn.sigmoid(jax.random.normal(k1, (B, C, H, W), dtype=jnp.float32))
    targets = (jax.random.uniform(k2, (B, C, H, W)) > 0.5).astype(jnp.float32)
    lv_loss = jax.random.uniform(k3, (), dtype=jnp.float32)

    out = weighted_dice_bce_unsup(inputs, targets, lv_loss)
    out = jax.block_until_ready(out)

    ref = _reference(inputs, targets, lv_loss)
    assert jnp.allclose(out, ref, rtol=1e-4, atol=1e-5), (out, ref)

    print("KERNEL_OK")
</pallas_src>

<mosaic_0001>
module attributes {stable_mosaic.version = 11 : i64} {
  func.func @_wdice_bce_kernel(%arg0: i32, %arg1: memref<1xf32, #tpu.memory_space<smem>>, %arg2: memref<16x128xf32, #tpu.memory_space<vmem>>, %arg3: memref<16x128xf32, #tpu.memory_space<vmem>>, %arg4: memref<1x1xf32, #tpu.memory_space<vmem>>, %arg5: memref<16x1xf32, #tpu.memory_space<vmem>>, %arg6: memref<16x1xf32, #tpu.memory_space<vmem>>, %arg7: memref<16x1xf32, #tpu.memory_space<vmem>>, %arg8: memref<16x1xf32, #tpu.memory_space<vmem>>, %arg9: memref<16x1xf32, #tpu.memory_space<vmem>>, %arg10: memref<16x1xf32, #tpu.memory_space<vmem>>, %arg11: memref<16x1xf32, #tpu.memory_space<vmem>>) attributes {dimension_semantics = [#tpu.dimension_semantics<arbitrary>], iteration_bounds = array<i64: 1>, scalar_prefetch = 0 : i64, scratch_operands = 7 : i64, tpu.core_type = #tpu.core_type<tc>, window_params = [{transform_indices = @transform_0, window_bounds = array<i64: 1>}, {transform_indices = @transform_1, window_bounds = array<i64: 16, 128>}, {transform_indices = @transform_2, window_bounds = array<i64: 16, 128>}, {pipeline_mode = #tpu.pipeline_mode<synchronous>, transform_indices = @transform_3, window_bounds = array<i64: 1, 1>}]} {
    %c0_i32 = arith.constant 0 : i32
    %0 = arith.cmpi eq, %arg0, %c0_i32 : i32
    %1 = arith.extui %0 : i1 to i32
    %c0_i32_0 = arith.constant 0 : i32
    %2 = arith.cmpi ne, %1, %c0_i32_0 : i32
    scf.if %2 {
      %cst_47 = arith.constant 0.000000e+00 : f32
      %71 = vector.broadcast %cst_47 : f32 to vector<16x1xf32>
      %c0_48 = arith.constant 0 : index
      %c0_49 = arith.constant 0 : index
      %72 = vector.load %arg5[%c0_48, %c0_49] : memref<16x1xf32, #tpu.memory_space<vmem>>, vector<16x1xf32>
      tpu.vector_store %arg5[%c0_48, %c0_49], %71 {strides = array<i32>} : memref<16x1xf32, #tpu.memory_space<vmem>>, vector<16x1xf32>,
      %cst_50 = arith.constant 0.000000e+00 : f32
      %73 = vector.broadcast %cst_50 : f32 to vector<16x1xf32>
      %c0_51 = arith.constant 0 : index
      %c0_52 = arith.constant 0 : index
      %74 = vector.load %arg6[%c0_51, %c0_52] : memref<16x1xf32, #tpu.memory_space<vmem>>, vector<16x1xf32>
      tpu.vector_store %arg6[%c0_51, %c0_52], %73 {strides = array<i32>} : memref<16x1xf32, #tpu.memory_space<vmem>>, vector<16x1xf32>,
      %cst_53 = arith.constant 0.000000e+00 : f32
      %75 = vector.broadcast %cst_53 : f32 to vector<16x1xf32>
      %c0_54 = arith.constant 0 : index
      %c0_55 = arith.constant 0 : index
      %76 = vector.load %arg7[%c0_54, %c0_55] : memref<16x1xf32, #tpu.memory_space<vmem>>, vector<16x1xf32>
      tpu.vector_store %arg7[%c0_54, %c0_55], %75 {strides = array<i32>} : memref<16x1xf32, #tpu.memory_space<vmem>>, vector<16x1xf32>,
      %cst_56 = arith.constant 0.000000e+00 : f32
      %77 = vector.broadcast %cst_56 : f32 to vector<16x1xf32>
      %c0_57 = arith.constant 0 : index
      %c0_58 = arith.constant 0 : index
      %78 = vector.load %arg8[%c0_57, %c0_58] : memref<16x1xf32, #tpu.memory_space<vmem>>, vector<16x1xf32>
      tpu.vector_store %arg8[%c0_57, %c0_58], %77 {strides = array<i32>} : memref<16x1xf32, #tpu.memory_space<vmem>>, vector<16x1xf32>,
      %cst_59 = arith.constant 0.000000e+00 : f32
      %79 = vector.broadcast %cst_59 : f32 to vector<16x1xf32>
      %c0_60 = arith.constant 0 : index
      %c0_61 = arith.constant 0 : index
      %80 = vector.load %arg9[%c0_60, %c0_61] : memref<16x1xf32, #tpu.memory_space<vmem>>, vector<16x1xf32>
      tpu.vector_store %arg9[%c0_60, %c0_61], %79 {strides = array<i32>} : memref<16x1xf32, #tpu.memory_space<vmem>>, vector<16x1xf32>,
      %cst_62 = arith.constant 0.000000e+00 : f32
      %81 = vector.broadcast %cst_62 : f32 to vector<16x1xf32>
      %c0_63 = arith.constant 0 : index
      %c0_64 = arith.constant 0 : index
      %82 = vector.load %arg10[%c0_63, %c0_64] : memref<16x1xf32, #tpu.memory_space<vmem>>, vector<16x1xf32>
      tpu.vector_store %arg10[%c0_63, %c0_64], %81 {strides = array<i32>} : memref<16x1xf32, #tpu.memory_space<vmem>>, vector<16x1xf32>,
      %cst_65 = arith.constant 0.000000e+00 : f32
      %83 = vector.broadcast %cst_65 : f32 to vector<16x1xf32>
      %c0_66 = arith.constant 0 : index
      %c0_67 = arith.constant 0 : index
      %84 = vector.load %arg11[%c0_66, %c0_67] : memref<16x1xf32, #tpu.memory_space<vmem>>, vector<16x1xf32>
      tpu.vector_store %arg11[%c0_66, %c0_67], %83 {strides = array<i32>} : memref<16x1xf32, #tpu.memory_space<vmem>>, vector<16x1xf32>,
    } else {
    }
    %c0 = arith.constant 0 : index
    %c0_1 = arith.constant 0 : index
    %3 = vector.load %arg2[%c0, %c0_1] : memref<16x128xf32, #tpu.memory_space<vmem>>, vector<16x128xf32>
    %c0_2 = arith.constant 0 : index
    %c0_3 = arith.constant 0 : index
    %4 = vector.load %arg3[%c0_2, %c0_3] : memref<16x128xf32, #tpu.memory_space<vmem>>, vector<16x128xf32>
    %c0_4 = arith.constant 0 : index
    %c0_5 = arith.constant 0 : index
    %5 = vector.load %arg5[%c0_4, %c0_5] : memref<16x1xf32, #tpu.memory_space<vmem>>, vector<16x1xf32>
    %6 = arith.mulf %3, %4 : vector<16x128xf32>
    %cst = arith.constant dense<0.000000e+00> : vector<16xf32>
    %7 = vector.multi_reduction <add>, %6, %cst [1] : vector<16x128xf32> to vector<16xf32>
    %8 = vector.shape_cast %7 : vector<16xf32> to vector<16x1xf32>
    %9 = arith.addf %5, %8 : vector<16x1xf32>
    %c0_6 = arith.constant 0 : index
    %c0_7 = arith.constant 0 : index
    %10 = vector.load %arg5[%c0_6, %c0_7] : memref<16x1xf32, #tpu.memory_space<vmem>>, vector<16x1xf32>
    tpu.vector_store %arg5[%c0_6, %c0_7], %9 {strides = array<i32>} : memref<16x1xf32, #tpu.memory_space<vmem>>, vector<16x1xf32>,
    %c0_8 = arith.constant 0 : index
    %c0_9 = arith.constant 0 : index
    %11 = vector.load %arg6[%c0_8, %c0_9] : memref<16x1xf32, #tpu.memory_space<vmem>>, vector<16x1xf32>
    %12 = arith.mulf %3, %3 : vector<16x128xf32>
    %cst_10 = arith.constant dense<0.000000e+00> : vector<16xf32>
    %13 = vector.multi_reduction <add>, %12, %cst_10 [1] : vector<16x128xf32> to vector<16xf32>
    %14 = vector.shape_cast %13 : vector<16xf32> to vector<16x1xf32>
    %15 = arith.addf %11, %14 : vector<16x1xf32>
    %c0_11 = arith.constant 0 : index
    %c0_12 = arith.constant 0 : index
    %16 = vector.load %arg6[%c0_11, %c0_12] : memref<16x1xf32, #tpu.memory_space<vmem>>, vector<16x1xf32>
    tpu.vector_store %arg6[%c0_11, %c0_12], %15 {strides = array<i32>} : memref<16x1xf32, #tpu.memory_space<vmem>>, vector<16x1xf32>,
    %c0_13 = arith.constant 0 : index
    %c0_14 = arith.constant 0 : index
    %17 = vector.load %arg7[%c0_13, %c0_14] : memref<16x1xf32, #tpu.memory_space<vmem>>, vector<16x1xf32>
    %18 = arith.mulf %4, %4 : vector<16x128xf32>
    %cst_15 = arith.constant dense<0.000000e+00> : vector<16xf32>
    %19 = vector.multi_reduction <add>, %18, %cst_15 [1] : vector<16x128xf32> to vector<16xf32>
    %20 = vector.shape_cast %19 : vector<16xf32> to vector<16x1xf32>
    %21 = arith.addf %17, %20 : vector<16x1xf32>
    %c0_16 = arith.constant 0 : index
    %c0_17 = arith.constant 0 : index
    %22 = vector.load %arg7[%c0_16, %c0_17] : memref<16x1xf32, #tpu.memory_space<vmem>>, vector<16x1xf32>
    tpu.vector_store %arg7[%c0_16, %c0_17], %21 {strides = array<i32>} : memref<16x1xf32, #tpu.memory_space<vmem>>, vector<16x1xf32>,
    %23 = math.log %3 : vector<16x128xf32>
    %cst_18 = arith.constant -1.000000e+02 : f32
    %24 = vector.broadcast %cst_18 : f32 to vector<16x128xf32>
    %25 = arith.maximumf %23, %24 : vector<16x128xf32>
    %cst_19 = arith.constant 1.000000e+00 : f32
    %26 = vector.broadcast %cst_19 : f32 to vector<16x128xf32>
    %27 = arith.subf %26, %3 : vector<16x128xf32>
    %28 = math.log %27 : vector<16x128xf32>
    %cst_20 = arith.constant -1.000000e+02 : f32
    %29 = vector.broadcast %cst_20 : f32 to vector<16x128xf32>
    %30 = arith.maximumf %28, %29 : vector<16x128xf32>
    %31 = arith.mulf %4, %25 : vector<16x128xf32>
    %cst_21 = arith.constant 1.000000e+00 : f32
    %32 = vector.broadcast %cst_21 : f32 to vector<16x128xf32>
    %33 = arith.subf %32, %4 : vector<16x128xf32>
    %34 = arith.mulf %33, %30 : vector<16x128xf32>
    %35 = arith.addf %31, %34 : vector<16x128xf32>
    %cst_22 = arith.constant 0.000000e+00 : f32
    %36 = vector.broadcast %cst_22 : f32 to vector<16x128xf32>
    %37 = arith.subf %36, %35 : vector<16x128xf32>
    %cst_23 = arith.constant 5.000000e-01 : f32
    %38 = vector.broadcast %cst_23 : f32 to vector<16x128xf32>
    %39 = arith.cmpf ogt, %4, %38 : vector<16x128xf32>
    %40 = arith.extui %39 : vector<16x128xi1> to vector<16x128xi32>
    %41 = arith.sitofp %40 : vector<16x128xi32> to vector<16x128xf32>
    %cst_24 = arith.constant 5.000000e-01 : f32
    %42 = vector.broadcast %cst_24 : f32 to vector<16x128xf32>
    %43 = arith.cmpf olt, %4, %42 : vector<16x128xf32>
    %44 = arith.extui %43 : vector<16x128xi1> to vector<16x128xi32>
    %45 = arith.sitofp %44 : vector<16x128xi32> to vector<16x128xf32>
    %c0_25 = arith.constant 0 : index
    %c0_26 = arith.constant 0 : index
    %46 = vector.load %arg8[%c0_25, %c0_26] : memref<16x1xf32, #tpu.memory_space<vmem>>, vector<16x1xf32>
    %cst_27 = arith.constant dense<0.000000e+00> : vector<16xf32>
    %47 = vector.multi_reduction <add>, %41, %cst_27 [1] : vector<16x128xf32> to vector<16xf32>
    %48 = vector.shape_cast %47 : vector<16xf32> to vector<16x1xf32>
    %49 = arith.addf %46, %48 : vector<16x1xf32>
    %c0_28 = arith.constant 0 : index
    %c0_29 = arith.constant 0 : index
    %50 = vector.load %arg8[%c0_28, %c0_29] : memref<16x1xf32, #tpu.memory_space<vmem>>, vector<16x1xf32>
    tpu.vector_store %arg8[%c0_28, %c0_29], %49 {strides = array<i32>} : memref<16x1xf32, #tpu.memory_space<vmem>>, vector<16x1xf32>,
    %c0_30 = arith.constant 0 : index
    %c0_31 = arith.constant 0 : index
    %51 = vector.load %arg9[%c0_30, %c0_31] : memref<16x1xf32, #tpu.memory_space<vmem>>, vector<16x1xf32>
    %cst_32 = arith.constant dense<0.000000e+00> : vector<16xf32>
    %52 = vector.multi_reduction <add>, %45, %cst_32 [1] : vector<16x128xf32> to vector<16xf32>
    %53 = vector.shape_cast %52 : vector<16xf32> to vector<16x1xf32>
    %54 = arith.addf %51, %53 : vector<16x1xf32>
    %c0_33 = arith.constant 0 : index
    %c0_34 = arith.constant 0 : index
    %55 = vector.load %arg9[%c0_33, %c0_34] : memref<16x1xf32, #tpu.memory_space<vmem>>, vector<16x1xf32>
    tpu.vector_store %arg9[%c0_33, %c0_34], %54 {strides = array<i32>} : memref<16x1xf32, #tpu.memory_space<vmem>>, vector<16x1xf32>,
    %c0_35 = arith.constant 0 : index
    %c0_36 = arith.constant 0 : index
    %56 = vector.load %arg10[%c0_35, %c0_36] : memref<16x1xf32, #tpu.memory_space<vmem>>, vector<16x1xf32>
    %57 = arith.mulf %41, %37 : vector<16x128xf32>
    %cst_37 = arith.constant dense<0.000000e+00> : vector<16xf32>
    %58 = vector.multi_reduction <add>, %57, %cst_37 [1] : vector<16x128xf32> to vector<16xf32>
    %59 = vector.shape_cast %58 : vector<16xf32> to vector<16x1xf32>
    %60 = arith.addf %56, %59 : vector<16x1xf32>
    %c0_38 = arith.constant 0 : index
    %c0_39 = arith.constant 0 : index
    %61 = vector.load %arg10[%c0_38, %c0_39] : memref<16x1xf32, #tpu.memory_space<vmem>>, vector<16x1xf32>
    tpu.vector_store %arg10[%c0_38, %c0_39], %60 {strides = array<i32>} : memref<16x1xf32, #tpu.memory_space<vmem>>, vector<16x1xf32>,
    %c0_40 = arith.constant 0 : index
    %c0_41 = arith.constant 0 : index
    %62 = vector.load %arg11[%c0_40, %c0_41] : memref<16x1xf32, #tpu.memory_space<vmem>>, vector<16x1xf32>
    %63 = arith.mulf %45, %37 : vector<16x128xf32>
    %cst_42 = arith.constant dense<0.000000e+00> : vector<16xf32>
    %64 = vector.multi_reduction <add>, %63, %cst_42 [1] : vector<16x128xf32> to vector<16xf32>
    %65 = vector.shape_cast %64 : vector<16xf32> to vector<16x1xf32>
    %66 = arith.addf %62, %65 : vector<16x1xf32>
    %c0_43 = arith.constant 0 : index
    %c0_44 = arith.constant 0 : index
    %67 = vector.load %arg11[%c0_43, %c0_44] : memref<16x1xf32, #tpu.memory_space<vmem>>, vector<16x1xf32>
    tpu.vector_store %arg11[%c0_43, %c0_44], %66 {strides = array<i32>} : memref<16x1xf32, #tpu.memory_space<vmem>>, vector<16x1xf32>,
    %c0_i32_45 = arith.constant 0 : i32
    %68 = arith.cmpi eq, %arg0, %c0_i32_45 : i32
    %69 = arith.extui %68 : i1 to i32
    %c0_i32_46 = arith.constant 0 : i32
    %70 = arith.cmpi ne, %69, %c0_i32_46 : i32
    scf.if %70 {
      %c0_47 = arith.constant 0 : index
      %c0_48 = arith.constant 0 : index
      %71 = vector.load %arg5[%c0_47, %c0_48] : memref<16x1xf32, #tpu.memory_space<vmem>>, vector<16x1xf32>
      %c0_49 = arith.constant 0 : index
      %c0_50 = arith.constant 0 : index
      %72 = vector.load %arg6[%c0_49, %c0_50] : memref<16x1xf32, #tpu.memory_space<vmem>>, vector<16x1xf32>
      %c0_51 = arith.constant 0 : index
      %c0_52 = arith.constant 0 : index
      %73 = vector.load %arg7[%c0_51, %c0_52] : memref<16x1xf32, #tpu.memory_space<vmem>>, vector<16x1xf32>
      %74 = vector.extract_strided_slice %71 {offsets = [0, 0], sizes = [8, 1], strides = [1, 1]} : vector<16x1xf32> to vector<8x1xf32>
      %75 = vector.shape_cast %74 : vector<8x1xf32> to vector<1x8x1xf32>
      %cst_53 = arith.constant dense<0.000000e+00> : vector<1xf32>
      %76 = vector.multi_reduction <add>, %75, %cst_53 [1, 2] : vector<1x8x1xf32> to vector<1xf32>
      %77 = vector.shape_cast %76 : vector<1xf32> to vector<1x1x1xf32>
      %78 = vector.extract %77[0, 0, 0] : f32 from vector<1x1x1xf32>
      %79 = vector.extract_strided_slice %72 {offsets = [0, 0], sizes = [8, 1], strides = [1, 1]} : vector<16x1xf32> to vector<8x1xf32>
      %80 = vector.shape_cast %79 : vector<8x1xf32> to vector<1x8x1xf32>
      %cst_54 = arith.constant dense<0.000000e+00> : vector<1xf32>
      %81 = vector.multi_reduction <add>, %80, %cst_54 [1, 2] : vector<1x8x1xf32> to vector<1xf32>
      %82 = vector.shape_cast %81 : vector<1xf32> to vector<1x1x1xf32>
      %83 = vector.extract %82[0, 0, 0] : f32 from vector<1x1x1xf32>
      %84 = vector.extract_strided_slice %73 {offsets = [0, 0], sizes = [8, 1], strides = [1, 1]} : vector<16x1xf32> to vector<8x1xf32>
      %85 = vector.shape_cast %84 : vector<8x1xf32> to vector<1x8x1xf32>
      %cst_55 = arith.constant dense<0.000000e+00> : vector<1xf32>
      %86 = vector.multi_reduction <add>, %85, %cst_55 [1, 2] : vector<1x8x1xf32> to vector<1xf32>
      %87 = vector.shape_cast %86 : vector<1xf32> to vector<1x1x1xf32>
      %88 = vector.extract %87[0, 0, 0] : f32 from vector<1x1x1xf32>
      %cst_56 = arith.constant 5.000000e-01 : f32
      %89 = arith.mulf %cst_56, %78 : f32
      %cst_57 = arith.constant 9.99999974E-6 : f32
      %90 = arith.addf %89, %cst_57 : f32
      %91 = arith.addf %83, %88 : f32
      %cst_58 = arith.constant 2.500000e-01 : f32
      %92 = arith.mulf %cst_58, %91 : f32
      %cst_59 = arith.constant 9.99999974E-6 : f32
      %93 = arith.addf %92, %cst_59 : f32
      %94 = arith.divf %90, %93 : f32
      %cst_60 = arith.constant 1.000000e+00 : f32
      %95 = arith.subf %cst_60, %94 : f32
      %cst_61 = arith.constant 0.000000e+00 : f32
      %96 = arith.addf %cst_61, %95 : f32
      %97 = vector.extract_strided_slice %71 {offsets = [8, 0], sizes = [8, 1], strides = [1, 1]} : vector<16x1xf32> to vector<8x1xf32>
      %98 = vector.shape_cast %97 : vector<8x1xf32> to vector<1x8x1xf32>
      %cst_62 = arith.constant dense<0.000000e+00> : vector<1xf32>
      %99 = vector.multi_reduction <add>, %98, %cst_62 [1, 2] : vector<1x8x1xf32> to vector<1xf32>
      %100 = vector.shape_cast %99 : vector<1xf32> to vector<1x1x1xf32>
      %101 = vector.extract %100[0, 0, 0] : f32 from vector<1x1x1xf32>
      %102 = vector.extract_strided_slice %72 {offsets = [8, 0], sizes = [8, 1], strides = [1, 1]} : vector<16x1xf32> to vector<8x1xf32>
      %103 = vector.shape_cast %102 : vector<8x1xf32> to vector<1x8x1xf32>
      %cst_63 = arith.constant dense<0.000000e+00> : vector<1xf32>
      %104 = vector.multi_reduction <add>, %103, %cst_63 [1, 2] : vector<1x8x1xf32> to vector<1xf32>
      %105 = vector.shape_cast %104 : vector<1xf32> to vector<1x1x1xf32>
      %106 = vector.extract %105[0, 0, 0] : f32 from vector<1x1x1xf32>
      %107 = vector.extract_strided_slice %73 {offsets = [8, 0], sizes = [8, 1], strides = [1, 1]} : vector<16x1xf32> to vector<8x1xf32>
      %108 = vector.shape_cast %107 : vector<8x1xf32> to vector<1x8x1xf32>
      %cst_64 = arith.constant dense<0.000000e+00> : vector<1xf32>
      %109 = vector.multi_reduction <add>, %108, %cst_64 [1, 2] : vector<1x8x1xf32> to vector<1xf32>
      %110 = vector.shape_cast %109 : vector<1xf32> to vector<1x1x1xf32>
      %111 = vector.extract %110[0, 0, 0] : f32 from vector<1x1x1xf32>
      %cst_65 = arith.constant 5.000000e-01 : f32
      %112 = arith.mulf %cst_65, %101 : f32
      %cst_66 = arith.constant 9.99999974E-6 : f32
      %113 = arith.addf %112, %cst_66 : f32
      %114 = arith.addf %106, %111 : f32
      %cst_67 = arith.constant 2.500000e-01 : f32
      %115 = arith.mulf %cst_67, %114 : f32
      %cst_68 = arith.constant 9.99999974E-6 : f32
      %116 = arith.addf %115, %cst_68 : f32
      %117 = arith.divf %113, %116 : f32
      %cst_69 = arith.constant 1.000000e+00 : f32
      %118 = arith.subf %cst_69, %117 : f32
      %119 = arith.addf %96, %118 : f32
      %cst_70 = arith.constant 2.000000e+00 : f32
      %120 = arith.divf %119, %cst_70 : f32
      %c0_71 = arith.constant 0 : index
      %c0_72 = arith.constant 0 : index
      %121 = vector.load %arg8[%c0_71, %c0_72] : memref<16x1xf32, #tpu.memory_space<vmem>>, vector<16x1xf32>
      %122 = vector.shape_cast %121 : vector<16x1xf32> to vector<1x16x1xf32>
      %cst_73 = arith.constant dense<0.000000e+00> : vector<1xf32>
      %123 = vector.multi_reduction <add>, %122, %cst_73 [1, 2] : vector<1x16x1xf32> to vector<1xf32>
      %124 = vector.shape_cast %123 : vector<1xf32> to vector<1x1x1xf32>
      %125 = vector.extract %124[0, 0, 0] : f32 from vector<1x1x1xf32>
      %cst_74 = arith.constant 9.99999996E-13 : f32
      %126 = arith.addf %125, %cst_74 : f32
      %c0_75 = arith.constant 0 : index
      %c0_76 = arith.constant 0 : index
      %127 = vector.load %arg9[%c0_75, %c0_76] : memref<16x1xf32, #tpu.memory_space<vmem>>, vector<16x1xf32>
      %128 = vector.shape_cast %127 : vector<16x1xf32> to vector<1x16x1xf32>
      %cst_77 = arith.constant dense<0.000000e+00> : vector<1xf32>
      %129 = vector.multi_reduction <add>, %128, %cst_77 [1, 2] : vector<1x16x1xf32> to vector<1xf32>
      %130 = vector.shape_cast %129 : vector<1xf32> to vector<1x1x1xf32>
      %131 = vector.extract %130[0, 0, 0] : f32 from vector<1x1x1xf32>
      %cst_78 = arith.constant 0.000000e+00 : f32
      %132 = arith.subf %131, %cst_78 : f32
      %cst_79 = arith.constant 9.99999996E-13 : f32
      %133 = arith.addf %132, %cst_79 : f32
      %c0_80 = arith.constant 0 : index
      %c0_81 = arith.constant 0 : index
      %134 = vector.load %arg10[%c0_80, %c0_81] : memref<16x1xf32, #tpu.memory_space<vmem>>, vector<16x1xf32>
      %135 = vector.shape_cast %134 : vector<16x1xf32> to vector<1x16x1xf32>
      %cst_82 = arith.constant dense<0.000000e+00> : vector<1xf32>
      %136 = vector.multi_reduction <add>, %135, %cst_82 [1, 2] : vector<1x16x1xf32> to vector<1xf32>
      %137 = vector.shape_cast %136 : vector<1xf32> to vector<1x1x1xf32>
      %138 = vector.extract %137[0, 0, 0] : f32 from vector<1x1x1xf32>
      %cst_83 = arith.constant 5.000000e-01 : f32
      %139 = arith.mulf %cst_83, %138 : f32
      %140 = arith.divf %139, %126 : f32
      %c0_84 = arith.constant 0 : index
      %c0_85 = arith.constant 0 : index
      %141 = vector.load %arg11[%c0_84, %c0_85] : memref<16x1xf32, #tpu.memory_space<vmem>>, vector<16x1xf32>
      %142 = vector.shape_cast %141 : vector<16x1xf32> to vector<1x16x1xf32>
      %cst_86 = arith.constant dense<0.000000e+00> : vector<1xf32>
      %143 = vector.multi_reduction <add>, %142, %cst_86 [1, 2] : vector<1x16x1xf32> to vector<1xf32>
      %144 = vector.shape_cast %143 : vector<1xf32> to vector<1x1x1xf32>
      %145 = vector.extract %144[0, 0, 0] : f32 from vector<1x1x1xf32>
      %cst_87 = arith.constant 5.000000e-01 : f32
      %146 = arith.mulf %cst_87, %145 : f32
      %147 = arith.divf %146, %133 : f32
      %148 = arith.addf %140, %147 : f32
      %cst_88 = arith.constant 1.000000e+00 : f32
      %149 = arith.mulf %cst_88, %120 : f32
      %cst_89 = arith.constant 1.000000e+00 : f32
      %150 = arith.mulf %cst_89, %148 : f32
      %151 = arith.addf %149, %150 : f32
      %c0_90 = arith.constant 0 : index
      %152 = memref.load %arg1[%c0_90] : memref<1xf32, #tpu.memory_space<smem>>
      %cst_91 = arith.constant 1.000000e-01 : f32
      %153 = arith.mulf %cst_91, %152 : f32
      %154 = arith.addf %151, %153 : f32
      %155 = vector.broadcast %154 : f32 to vector<1x1xf32>
      %c0_92 = arith.constant 0 : index
      %c0_93 = arith.constant 0 : index
      %156 = vector.load %arg4[%c0_92, %c0_93] : memref<1x1xf32, #tpu.memory_space<vmem>>, vector<1x1xf32>
      tpu.vector_store %arg4[%c0_92, %c0_93], %155 {strides = array<i32>} : memref<1x1xf32, #tpu.memory_space<vmem>>, vector<1x1xf32>,
    } else {
    }
    return
  }
  func.func @transform_0(%arg0: i32) -> i32 {
    %c0_i32 = arith.constant 0 : i32
    %c0_i32_0 = arith.constant 0 : i32
    return %c0_i32 : i32
  }
  func.func @transform_1(%arg0: i32) -> (i32, i32) {
    %c0_i32 = arith.constant 0 : i32
    %c0_i32_0 = arith.constant 0 : i32
    return %c0_i32, %arg0 : i32, i32
  }
  func.func @transform_2(%arg0: i32) -> (i32, i32) {
    %c0_i32 = arith.constant 0 : i32
    %c0_i32_0 = arith.constant 0 : i32
    return %c0_i32, %arg0 : i32, i32
  }
  func.func @transform_3(%arg0: i32) -> (i32, i32) {
    %c0_i32 = arith.constant 0 : i32
    %c0_i32_0 = arith.constant 0 : i32
    %c0_i32_1 = arith.constant 0 : i32
    return %c0_i32, %c0_i32_0 : i32, i32
  }
}

</mosaic_0001>

<llo_original>
// kernel: tpu_custom_call.1
$region0: #{tpu_custom_call.1}
  #allocation0 [shape = 'u32[]', space=smem, size = 0x4, offset = 0x4, fixed_abs, tag = 'smem constant byte address 0x4 - core index']
  #allocation1 [shape = 'u32[144,128]{1,0:T(1,128)}', space=vmem, size = 0x12000, scoped, tag = 'internal scratch']
  #allocation2 [shape = 'f32[16,1]{1,0:T(8,128)}', space=vmem, size = 0x2000, scoped, tag = 'scratch operand']
  #allocation3 [shape = 'f32[16,1]{1,0:T(8,128)}', space=vmem, size = 0x2000, scoped, tag = 'scratch operand']
  #allocation4 [shape = 'f32[16,1]{1,0:T(8,128)}', space=vmem, size = 0x2000, scoped, tag = 'scratch operand']
  #allocation5 [shape = 'f32[16,1]{1,0:T(8,128)}', space=vmem, size = 0x2000, scoped, tag = 'scratch operand']
  #allocation6 [shape = 'f32[16,1]{1,0:T(8,128)}', space=vmem, size = 0x2000, scoped, tag = 'scratch operand']
  #allocation7 [shape = 'f32[16,1]{1,0:T(8,128)}', space=vmem, size = 0x2000, scoped, tag = 'scratch operand']
  #allocation8 [shape = 'f32[16,1]{1,0:T(8,128)}', space=vmem, size = 0x2000, scoped, tag = 'scratch operand']
  #allocation9 [shape = 'f32[1]{0:T(128)S(6)}', space=smem, size = 0x200, scoped, tag = 'scoped memory for tpu_custom_call.1']
  %s0 = inlined_call_operand.<no memory space> [shape: f32[1], index: 0, kind: input, shape index: {}]
  %s1 = inlined_call_operand.hbm [shape: f32[16,128], index: 1, kind: input, shape index: {}]
  %s2 = inlined_call_operand.hbm [shape: f32[16,128], index: 2, kind: input, shape index: {}]
  %s3 = inlined_call_operand.hbm [shape: f32[1,1], index: 3, kind: output, shape index: {}]
  %s4 = sld [smem:[#allocation0]]
  $region38: #{tpu_custom_call.1} parent=0
    _
  %s6 = ssub.s32 1, %s4
  %s7 = scalar_select 0, %s6, %s4
  %8 = sst [smem:[#allocation9]] %s0
  $region1: #{tpu_custom_call.1} parent=0
    #allocation10 [shape = 'u8[8192]{0}', space=vmem, size = 0x2000, scoped, tag = 'input window, operand 1, single buffered']
    #allocation11 [shape = 's32[1]{0}', space=sflag, size = 0x4, scoped, tag = 'scoped memory for tpu_custom_call.1']
    #allocation12 [shape = 's32[1]{0}', space=sflag, size = 0x4, scoped, tag = 'scoped memory for tpu_custom_call.1']
    #allocation13 [shape = 'u8[8192]{0}', space=vmem, size = 0x2000, scoped, tag = 'input window, operand 2, single buffered']
    #allocation14 [shape = 's32[1]{0}', space=sflag, size = 0x4, scoped, tag = 'scoped memory for tpu_custom_call.1']
    #allocation15 [shape = 'u8[512]{0}', space=vmem, size = 0x400, scoped, tag = 'output window, operand 0, single buffered']
    %9 = vsyncpa [#allocation11], 0
    %10 = vsyncpa [#allocation14], 0
    %11 = vsyncpa [#allocation12], 0
    // Predicated region
    $region2: #{tpu_custom_call.1} parent=1 // pred_check
      _
    $region3: #{tpu_custom_call.1} parent=1 // pred_check_branch
      %13 = sbr.rel (0) target = $region5
    $region4: #{tpu_custom_call.1} parent=1 // pred_region
      _
    $region5: #{tpu_custom_call.1} parent=1 // pred_fallthru
      _
    // Predicated region
    $region6: #{tpu_custom_call.1} parent=1 // pred_check
      _
    $region7: #{tpu_custom_call.1} parent=1 // pred_check_branch
      %15 = sbr.rel (0) target = $region9
    $region8: #{tpu_custom_call.1} parent=1 // pred_region
      %s17 = ssub.s32 256, 256
      %18 = vsyncadd [#allocation11], %s17
      %s19 = sshll.u32 [#allocation10], 4
      %s20 = int_to_ptr.vmem [resolvable:$true] %s19
      %25 = dma.hbm_to_vmem [thread:$0]  %s1, 256, %s20, [#allocation11], 128, 128, 8
    $region9: #{tpu_custom_call.1} parent=1 // pred_fallthru
      _
    // Predicated region
    $region10: #{tpu_custom_call.1} parent=1 // pred_check
      _
    $region11: #{tpu_custom_call.1} parent=1 // pred_check_branch
      %27 = sbr.rel (0) target = $region13
    $region12: #{tpu_custom_call.1} parent=1 // pred_region
      %s29 = ssub.s32 256, 256
      %30 = vsyncadd [#allocation14], %s29
      %s31 = sshll.u32 [#allocation13], 4
      %s32 = int_to_ptr.vmem [resolvable:$true] %s31
      %37 = dma.hbm_to_vmem [thread:$0]  %s2, 256, %s32, [#allocation14], 128, 128, 8
    $region13: #{tpu_custom_call.1} parent=1 // pred_fallthru
      _
    // Predicated region
    $region14: #{tpu_custom_call.1} parent=1 // pred_check
      _
    $region15: #{tpu_custom_call.1} parent=1 // pred_check_branch
      %39 = sbr.rel (0) target = $region17
    $region16: #{tpu_custom_call.1} parent=1 // pred_region
      %40 = dma.done [#allocation11], 256
    $region17: #{tpu_custom_call.1} parent=1 // pred_fallthru
      _
    // Predicated region
    $region18: #{tpu_custom_call.1} parent=1 // pred_check
      _
    $region19: #{tpu_custom_call.1} parent=1 // pred_check_branch
      %42 = sbr.rel (0) target = $region21
    $region20: #{tpu_custom_call.1} parent=1 // pred_region
      %43 = dma.done [#allocation14], 256
    $region21: #{tpu_custom_call.1} parent=1 // pred_fallthru
      _
    %p44 = scmp.eq.s32.totalorder 0, 0
    // Predicated region
    $region22: #{tpu_custom_call.1} parent=1 // pred_check
      %p45 = pneg %p44
    $region23: #{tpu_custom_call.1} parent=1 // pred_check_branch
      %47 = sbr.rel (%p45) target = $region25
    $region24: #{tpu_custom_call.1} parent=1 // pred_region
      %vm48 = vcmask 7168
      %49 = vst.msk [vmem:[#allocation2] sm:$0xff] %vm48, 0.0
      %50 = vst.msk [vmem:[#allocation2 + $0x8] sm:$0xff] %vm48, 0.0
      %51 = vst.msk [vmem:[#allocation3] sm:$0xff] %vm48, 0.0
      %52 = vst.msk [vmem:[#allocation3 + $0x8] sm:$0xff] %vm48, 0.0
      %53 = vst.msk [vmem:[#allocation4] sm:$0xff] %vm48, 0.0
      %54 = vst.msk [vmem:[#allocation4 + $0x8] sm:$0xff] %vm48, 0.0
      %55 = vst.msk [vmem:[#allocation5] sm:$0xff] %vm48, 0.0
      %56 = vst.msk [vmem:[#allocation5 + $0x8] sm:$0xff] %vm48, 0.0
      %57 = vst.msk [vmem:[#allocation6] sm:$0xff] %vm48, 0.0
      %58 = vst.msk [vmem:[#allocation6 + $0x8] sm:$0xff] %vm48, 0.0
      %59 = vst.msk [vmem:[#allocation7] sm:$0xff] %vm48, 0.0
      %60 = vst.msk [vmem:[#allocation7 + $0x8] sm:$0xff] %vm48, 0.0
      %61 = vst.msk [vmem:[#allocation8] sm:$0xff] %vm48, 0.0
      %62 = vst.msk [vmem:[#allocation8 + $0x8] sm:$0xff] %vm48, 0.0
    $region25: #{tpu_custom_call.1} parent=1 // pred_fallthru
      _
    %v63 = vld [vmem:[#allocation10] sm:$0xff]
    %v64 = vld [vmem:[#allocation10 + $0x8] sm:$0xff]
    %v65 = vld [vmem:[#allocation13] sm:$0xff]
    %v66 = vld [vmem:[#allocation13 + $0x8] sm:$0xff]
    %v67 = vld [vmem:[#allocation2] sm:$0xff]
    %v68 = vld [vmem:[#allocation2 + $0x8] sm:$0xff]
    %v69 = vmul.f32 %v63, %v65
    %v70 = vmul.f32 %v64, %v66
    %71 = vadd.xlane.f32.xlu0 %v69
    %v72 = vpop.xlane.xlu0 %71
    %73 = vadd.xlane.f32.xlu0 %v70
    %v74 = vpop.xlane.xlu0 %73
    %v75 = vadd.f32 %v67, %v72
    %v76 = vadd.f32 %v68, %v74
    %vm77 = vcmask 7168
    %78 = vst.msk [vmem:[#allocation2] sm:$0xff] %vm77, %v75
    %79 = vst.msk [vmem:[#allocation2 + $0x8] sm:$0xff] %vm77, %v76
    %v80 = vld [vmem:[#allocation3] sm:$0xff]
    %v81 = vld [vmem:[#allocation3 + $0x8] sm:$0xff]
    %v82 = vmul.f32 %v63, %v63
    %v83 = vmul.f32 %v64, %v64
    %84 = vadd.xlane.f32.xlu0 %v82
    %v85 = vpop.xlane.xlu0 %84
    %86 = vadd.xlane.f32.xlu0 %v83
    %v87 = vpop.xlane.xlu0 %86
    %v88 = vadd.f32 %v80, %v85
    %v89 = vadd.f32 %v81, %v87
    %90 = vst.msk [vmem:[#allocation3] sm:$0xff] %vm77, %v88
    %91 = vst.msk [vmem:[#allocation3 + $0x8] sm:$0xff] %vm77, %v89
    %v92 = vld [vmem:[#allocation4] sm:$0xff]
    %v93 = vld [vmem:[#allocation4 + $0x8] sm:$0xff]
    %v94 = vmul.f32 %v65, %v65
    %v95 = vmul.f32 %v66, %v66
    %96 = vadd.xlane.f32.xlu0 %v94
    %v97 = vpop.xlane.xlu0 %96
    %98 = vadd.xlane.f32.xlu0 %v95
    %v99 = vpop.xlane.xlu0 %98
    %v100 = vadd.f32 %v92, %v97
    %v101 = vadd.f32 %v93, %v99
    %102 = vst.msk [vmem:[#allocation4] sm:$0xff] %vm77, %v100
    %103 = vst.msk [vmem:[#allocation4 + $0x8] sm:$0xff] %vm77, %v101
    %v104 = vlog2.pop %v63
    %v105 = vmul.f32 %v104, 0.6931472
    %v106 = vlog2.pop %v64
    %v107 = vmul.f32 %v106, 0.6931472
    %v108 = vmax.f32 %v105, -100.0
    %v109 = vmax.f32 %v107, -100.0
    %v110 = vsub.f32 1.0, %v63
    %v111 = vsub.f32 1.0, %v64
    %v112 = vlog2.pop %v110
    %v113 = vmul.f32 %v112, 0.6931472
    %v114 = vlog2.pop %v111
    %v115 = vmul.f32 %v114, 0.6931472
    %v116 = vmax.f32 %v113, -100.0
    %v117 = vmax.f32 %v115, -100.0
    %v118 = vmul.f32 %v65, %v108
    %v119 = vmul.f32 %v66, %v109
    %v120 = vsub.f32 1.0, %v65
    %v121 = vsub.f32 1.0, %v66
    %v122 = vmul.f32 %v120, %v116
    %v123 = vmul.f32 %v121, %v117
    %v124 = vadd.f32 %v118, %v122
    %v125 = vadd.f32 %v119, %v123
    %v126 = vsub.f32 0.0, %v124
    %v127 = vsub.f32 0.0, %v125
    %vm128 = vcmp.gt.f32.partialorder %v65, 0.5
    %vm129 = vcmp.gt.f32.partialorder %v66, 0.5
    %v130 = vsel %vm128, 1, 0
    %v131 = vsel %vm129, 1, 0
    %v132 = vcvt.s32.f32 %v130
    %v133 = vcvt.s32.f32 %v131
    %vm134 = vcmp.lt.f32.partialorder %v65, 0.5
    %vm135 = vcmp.lt.f32.partialorder %v66, 0.5
    %v136 = vsel %vm134, 1, 0
    %v137 = vsel %vm135, 1, 0
    %v138 = vcvt.s32.f32 %v136
    %v139 = vcvt.s32.f32 %v137
    %v140 = vld [vmem:[#allocation5] sm:$0xff]
    %v141 = vld [vmem:[#allocation5 + $0x8] sm:$0xff]
    %142 = vadd.xlane.f32.xlu0 %v132
    %v143 = vpop.xlane.xlu0 %142
    %144 = vadd.xlane.f32.xlu0 %v133
    %v145 = vpop.xlane.xlu0 %144
    %v146 = vadd.f32 %v140, %v143
    %v147 = vadd.f32 %v141, %v145
    %148 = vst.msk [vmem:[#allocation5] sm:$0xff] %vm77, %v146
    %149 = vst.msk [vmem:[#allocation5 + $0x8] sm:$0xff] %vm77, %v147
    %v150 = vld [vmem:[#allocation6] sm:$0xff]
    %v151 = vld [vmem:[#allocation6 + $0x8] sm:$0xff]
    %152 = vadd.xlane.f32.xlu0 %v138
    %v153 = vpop.xlane.xlu0 %152
    %154 = vadd.xlane.f32.xlu0 %v139
    %v155 = vpop.xlane.xlu0 %154
    %v156 = vadd.f32 %v150, %v153
    %v157 = vadd.f32 %v151, %v155
    %158 = vst.msk [vmem:[#allocation6] sm:$0xff] %vm77, %v156
    %159 = vst.msk [vmem:[#allocation6 + $0x8] sm:$0xff] %vm77, %v157
    %v160 = vld [vmem:[#allocation7] sm:$0xff]
    %v161 = vld [vmem:[#allocation7 + $0x8] sm:$0xff]
    %v162 = vmul.f32 %v132, %v126
    %v163 = vmul.f32 %v133, %v127
    %164 = vadd.xlane.f32.xlu0 %v162
    %v165 = vpop.xlane.xlu0 %164
    %166 = vadd.xlane.f32.xlu0 %v163
    %v167 = vpop.xlane.xlu0 %166
    %v168 = vadd.f32 %v160, %v165
    %v169 = vadd.f32 %v161, %v167
    %170 = vst.msk [vmem:[#allocation7] sm:$0xff] %vm77, %v168
    %171 = vst.msk [vmem:[#allocation7 + $0x8] sm:$0xff] %vm77, %v169
    %v172 = vld [vmem:[#allocation8] sm:$0xff]
    %v173 = vld [vmem:[#allocation8 + $0x8] sm:$0xff]
    %v174 = vmul.f32 %v138, %v126
    %v175 = vmul.f32 %v139, %v127
    %176 = vadd.xlane.f32.xlu0 %v174
    %v177 = vpop.xlane.xlu0 %176
    %178 = vadd.xlane.f32.xlu0 %v175
    %v179 = vpop.xlane.xlu0 %178
    %v180 = vadd.f32 %v172, %v177
    %v181 = vadd.f32 %v173, %v179
    %182 = vst.msk [vmem:[#allocation8] sm:$0xff] %vm77, %v180
    %183 = vst.msk [vmem:[#allocation8 + $0x8] sm:$0xff] %vm77, %v181
    // Predicated region
    $region26: #{tpu_custom_call.1} parent=1 // pred_check
      %p184 = pneg %p44
    $region27: #{tpu_custom_call.1} parent=1 // pred_check_branch
      %186 = sbr.rel (%p184) target = $region29
    $region28: #{tpu_custom_call.1} parent=1 // pred_region
      %v187 = vld [vmem:[#allocation2] sm:$0xff]
      %v188 = vld [vmem:[#allocation2 + $0x8] sm:$0xff]
      %v189 = vld [vmem:[#allocation3] sm:$0xff]
      %v190 = vld [vmem:[#allocation3 + $0x8] sm:$0xff]
      %v191 = vld [vmem:[#allocation4] sm:$0xff]
      %v192 = vld [vmem:[#allocation4 + $0x8] sm:$0xff]
      %v193 = vsel %vm77, %v187, 0.0
      %194 = vadd.xlane.f32.xlu0 %v193
      %v195 = vpop.xlane.xlu0 %194
      %v196 = vrot.slane %v195, 4
      %v197 = vadd.f32 %v195, %v196
      %v198 = vrot.slane %v197, 2
      %v199 = vadd.f32 %v197, %v198
      %v200 = vrot.slane %v199, 1
      %v201 = vadd.f32 %v199, %v200
      %s202 = vtos %v201
      %v203 = vsel %vm77, %v189, 0.0
      %204 = vadd.xlane.f32.xlu0 %v203
      %v205 = vpop.xlane.xlu0 %204
      %v206 = vrot.slane %v205, 4
      %v207 = vadd.f32 %v205, %v206
      %v208 = vrot.slane %v207, 2
      %v209 = vadd.f32 %v207, %v208
      %v210 = vrot.slane %v209, 1
      %v211 = vadd.f32 %v209, %v210
      %s212 = vtos %v211
      %v213 = vsel %vm77, %v191, 0.0
      %214 = vadd.xlane.f32.xlu0 %v213
      %v215 = vpop.xlane.xlu0 %214
      %v216 = vrot.slane %v215, 4
      %v217 = vadd.f32 %v215, %v216
      %v218 = vrot.slane %v217, 2
      %v219 = vadd.f32 %v217, %v218
      %v220 = vrot.slane %v219, 1
      %v221 = vadd.f32 %v219, %v220
      %s222 = vtos %v221
      %s223 = smul.f32 %s202, 0.5
      %s224 = sadd.f32 %s223, 1e-05
      %s225 = sadd.f32 %s212, %s222
      %s226 = smul.f32 %s225, 0.25
      %s227 = sadd.f32 %s226, 1e-05
      %v228 = vstv %s227
      %v229 = vrcp.pop %v228
      %s230 = vtos %v229
      %s231 = smul.f32 %s224, %s230
      %s232 = ssub.f32 1.0, %s231
      %s233 = sadd.f32 %s232, 0.0
      %v234 = vsel %vm77, %v188, 0.0
      %235 = vadd.xlane.f32.xlu0 %v234
      %v236 = vpop.xlane.xlu0 %235
      %v237 = vrot.slane %v236, 4
      %v238 = vadd.f32 %v236, %v237
      %v239 = vrot.slane %v238, 2
      %v240 = vadd.f32 %v238, %v239
      %v241 = vrot.slane %v240, 1
      %v242 = vadd.f32 %v240, %v241
      %s243 = vtos %v242
      %v244 = vsel %vm77, %v190, 0.0
      %245 = vadd.xlane.f32.xlu0 %v244
      %v246 = vpop.xlane.xlu0 %245
      %v247 = vrot.slane %v246, 4
      %v248 = vadd.f32 %v246, %v247
      %v249 = vrot.slane %v248, 2
      %v250 = vadd.f32 %v248, %v249
      %v251 = vrot.slane %v250, 1
      %v252 = vadd.f32 %v250, %v251
      %s253 = vtos %v252
      %v254 = vsel %vm77, %v192, 0.0
      %255 = vadd.xlane.f32.xlu0 %v254
      %v256 = vpop.xlane.xlu0 %255
      %v257 = vrot.slane %v256, 4
      %v258 = vadd.f32 %v256, %v257
      %v259 = vrot.slane %v258, 2
      %v260 = vadd.f32 %v258, %v259
      %v261 = vrot.slane %v260, 1
      %v262 = vadd.f32 %v260, %v261
      %s263 = vtos %v262
      %s264 = smul.f32 %s243, 0.5
      %s265 = sadd.f32 %s264, 1e-05
      %s266 = sadd.f32 %s253, %s263
      %s267 = smul.f32 %s266, 0.25
      %s268 = sadd.f32 %s267, 1e-05
      %v269 = vstv %s268
      %v270 = vrcp.pop %v269
      %s271 = vtos %v270
      %s272 = smul.f32 %s265, %s271
      %s273 = ssub.f32 1.0, %s272
      %s274 = sadd.f32 %s233, %s273
      %v275 = vrcp.pop 2.0
      %s276 = vtos %v275
      %s277 = smul.f32 %s274, %s276
      %v278 = vld [vmem:[#allocation5] sm:$0xff]
      %v279 = vld [vmem:[#allocation5 + $0x8] sm:$0xff]
      %v280 = vsel %vm77, %v278, 0.0
      %v281 = vsel %vm77, %v279, 0.0
      %v282 = vadd.f32 %v280, %v281
      %283 = vadd.xlane.f32.xlu0 %v282
      %v284 = vpop.xlane.xlu0 %283
      %v285 = vrot.slane %v284, 4
      %v286 = vadd.f32 %v284, %v285
      %v287 = vrot.slane %v286, 2
      %v288 = vadd.f32 %v286, %v287
      %v289 = vrot.slane %v288, 1
      %v290 = vadd.f32 %v288, %v289
      %s291 = vtos %v290
      %s292 = sadd.f32 %s291, 1e-12
      %v293 = vld [vmem:[#allocation6] sm:$0xff]
      %v294 = vld [vmem:[#allocation6 + $0x8] sm:$0xff]
      %v295 = vsel %vm77, %v293, 0.0
      %v296 = vsel %vm77, %v294, 0.0
      %v297 = vadd.f32 %v295, %v296
      %298 = vadd.xlane.f32.xlu0 %v297
      %v299 = vpop.xlane.xlu0 %298
      %v300 = vrot.slane %v299, 4
      %v301 = vadd.f32 %v299, %v300
      %v302 = vrot.slane %v301, 2
      %v303 = vadd.f32 %v301, %v302
      %v304 = vrot.slane %v303, 1
      %v305 = vadd.f32 %v303, %v304
      %s306 = vtos %v305
      %s307 = sadd.f32 %s306, 1e-12
      %v308 = vld [vmem:[#allocation7] sm:$0xff]
      %v309 = vld [vmem:[#allocation7 + $0x8] sm:$0xff]
      %v310 = vsel %vm77, %v308, 0.0
      %v311 = vsel %vm77, %v309, 0.0
      %v312 = vadd.f32 %v310, %v311
      %313 = vadd.xlane.f32.xlu0 %v312
      %v314 = vpop.xlane.xlu0 %313
      %v315 = vrot.slane %v314, 4
      %v316 = vadd.f32 %v314, %v315
      %v317 = vrot.slane %v316, 2
      %v318 = vadd.f32 %v316, %v317
      %v319 = vrot.slane %v318, 1
      %v320 = vadd.f32 %v318, %v319
      %s321 = vtos %v320
      %s322 = smul.f32 %s321, 0.5
      %v323 = vstv %s292
      %v324 = vrcp.pop %v323
      %s325 = vtos %v324
      %s326 = smul.f32 %s322, %s325
      %v327 = vld [vmem:[#allocation8] sm:$0xff]
      %v328 = vld [vmem:[#allocation8 + $0x8] sm:$0xff]
      %v329 = vsel %vm77, %v327, 0.0
      %v330 = vsel %vm77, %v328, 0.0
      %v331 = vadd.f32 %v329, %v330
      %332 = vadd.xlane.f32.xlu0 %v331
      %v333 = vpop.xlane.xlu0 %332
      %v334 = vrot.slane %v333, 4
      %v335 = vadd.f32 %v333, %v334
      %v336 = vrot.slane %v335, 2
      %v337 = vadd.f32 %v335, %v336
      %v338 = vrot.slane %v337, 1
      %v339 = vadd.f32 %v337, %v338
      %s340 = vtos %v339
      %s341 = smul.f32 %s340, 0.5
      %v342 = vstv %s307
      %v343 = vrcp.pop %v342
      %s344 = vtos %v343
      %s345 = smul.f32 %s341, %s344
      %s346 = sadd.f32 %s326, %s345
      %s347 = sadd.f32 %s277, %s346
      %s348 = sld [smem:[#allocation9]]
      %s349 = smul.f32 %s348, 0.1
      %s350 = sadd.f32 %s347, %s349
      %v351 = vstv %s350
      %vm352 = vcmask 0
      %353 = vst.msk [vmem:[#allocation15] sm:$0x1] %vm352, %v351
    $region29: #{tpu_custom_call.1} parent=1 // pred_fallthru
      _
    // Predicated region
    $region30: #{tpu_custom_call.1} parent=1 // pred_check
      _
    $region31: #{tpu_custom_call.1} parent=1 // pred_check_branch
      %355 = sbr.rel (0) target = $region33
    $region32: #{tpu_custom_call.1} parent=1 // pred_region
      %s357 = ssub.s32 16, 16
      %358 = vsyncadd [#allocation12], %s357
      %s360 = sshll.u32 [#allocation15], 4
      %s361 = int_to_ptr.vmem [resolvable:$true] %s360
      %363 = dma.vmem_to_hbm [thread:$0]  %s361, 16, %s3, [#allocation12]
    $region33: #{tpu_custom_call.1} parent=1 // pred_fallthru
      _
    // Predicated region
    $region34: #{tpu_custom_call.1} parent=1 // pred_check
      _
    $region35: #{tpu_custom_call.1} parent=1 // pred_check_branch
      %365 = sbr.rel (0) target = $region37
    $region36: #{tpu_custom_call.1} parent=1 // pred_region
      %366 = dma.done [#allocation12], 16
    $region37: #{tpu_custom_call.1} parent=1 // pred_fallthru
      _
    %367 = vsyncpa [#allocation11], 1
    %368 = vsyncpa [#allocation14], 1
    %369 = vsyncpa [#allocation12], 1

</llo_original>
